<compile_context>
chip_gen: v7x
topology: tpu7x:2x2x1
jax: 0.10.0
libtpu: 0.0.40
codegen_flags: <defaults>
</compile_context>

<pallas_src>
import functools

import jax
import jax.numpy as jnp
from jax.experimental import pallas as pl
from jax.experimental.pallas import tpu as pltpu


def _qnet_kernel(sT_ref, aT_ref, w1_ref, b1_ref, w2_ref, b2_ref, w3_ref, b3_ref,
                 o_ref, *, state_dim):
    """One batch tile.  Activations are (features, B_tile): batch on lanes."""
    # fc1 + ReLU : (H,S)@(S,B) + (H,A)@(A,B)  -- the torch.cat is folded in
    # by splitting W1's columns with static (free) slices.
    h1 = jnp.dot(w1_ref[:, :state_dim], sT_ref[...],
                 preferred_element_type=jnp.float32)
    h1 = h1 + jnp.dot(w1_ref[:, state_dim:], aT_ref[...],
                      preferred_element_type=jnp.float32)
    h1 = jnp.maximum(h1 + b1_ref[...], 0.0)
    # fc2 + ReLU : (H,H)@(H,B)
    h2 = jnp.dot(w2_ref[...], h1, preferred_element_type=jnp.float32)
    h2 = jnp.maximum(h2 + b2_ref[...], 0.0)
    # fc3        : (1,H)@(H,B)
    o_ref[...] = (jnp.dot(w3_ref[...], h2, preferred_element_type=jnp.float32)
                  + b3_ref[...]).astype(o_ref.dtype)


def qnetwork_forward_batched(states, actions, params, *, block_b=1024):
    """Batched Q(s,a): states (B,S), actions (B,A) -> (B,1) float32."""
    B, state_dim = states.shape
    action_dim = actions.shape[1]
    w1, b1 = params["w1"], params["b1"]
    w2, b2 = params["w2"], params["b2"]
    w3, b3 = params["w3"], params["b3"]
    hidden, in_dim = w1.shape
    assert in_dim == state_dim + action_dim

    # Pad the batch to a tile multiple and put it on the lane axis.
    bp = pl.cdiv(B, block_b) * block_b
    sT = states.astype(jnp.float32).T
    aT = actions.astype(jnp.float32).T
    if bp != B:
        sT = jnp.zeros((state_dim, bp), jnp.float32).at[:, :B].set(sT)
        aT = jnp.zeros((action_dim, bp), jnp.float32).at[:, :B].set(aT)

    batch_tile = lambda rows: pl.BlockSpec((rows, block_b), lambda i: (0, i))
    resident = lambda shape: pl.BlockSpec(shape, lambda i: (0, 0))  # VMEM-resident

    out = pl.pallas_call(
        functools.partial(_qnet_kernel, state_dim=state_dim),
        out_shape=jax.ShapeDtypeStruct((1, bp), jnp.float32),
        grid=(bp // block_b,),
        in_specs=[
            batch_tile(state_dim),         # state^T   (S, B_tile)
            batch_tile(action_dim),        # action^T  (A, B_tile)
            resident((hidden, in_dim)),    # W1
            resident((hidden, 1)),         # b1
            resident((hidden, hidden)),    # W2
            resident((hidden, 1)),         # b2
            resident((1, hidden)),         # W3
            resident((1, 1)),              # b3
        ],
        out_specs=batch_tile(1),
        compiler_params=pltpu.CompilerParams(
            dimension_semantics=("parallel",)),  # batch tiles across v7x's 2 TCs
    )(sT, aT, w1, b1, w2, b2, w3, b3)

    return out[0, :B].reshape(B, 1)


def qnetwork_forward(state, action, params):
    """Unbatched forward with the exact nn.Module signature: (S,),(A,) -> (1,).

    Per the perf review, a standalone pallas_call for one ~1.3 KFLOP sample is
    pure launch/DMA overhead, so this path is plain jnp (XLA fuses the three
    tiny dots); use qnetwork_forward_batched for anything with a batch."""
    x = jnp.concatenate((state, action), axis=0).astype(jnp.float32)
    h1 = jnp.maximum(params["w1"] @ x + params["b1"][:, 0], 0.0)
    h2 = jnp.maximum(params["w2"] @ h1 + params["b2"][:, 0], 0.0)
    return params["w3"] @ h2 + params["b3"][:, 0]


def init_params(key, state_dim, action_dim=1, hidden_size=128, dtype=jnp.float32):
    """nn.Linear-style U(-1/sqrt(fan_in), +1/sqrt(fan_in)) init.
    Weights kept in PyTorch (out_features, in_features) layout; biases (out, 1).
    Use dtype=jnp.bfloat16 on v6e/v7x to halve weight/activation DMA bytes."""
    in_dim = state_dim + action_dim
    ks = jax.random.split(key, 6)

    def lin(kw, kb, fan_in, fan_out):
        bound = 1.0 / float(fan_in) ** 0.5
        w = jax.random.uniform(kw, (fan_out, fan_in), jnp.float32, -bound, bound)
        b = jax.random.uniform(kb, (fan_out, 1), jnp.float32, -bound, bound)
        return w.astype(dtype), b.astype(dtype)

    w1, b1 = lin(ks[0], ks[1], in_dim, hidden_size)
    w2, b2 = lin(ks[2], ks[3], hidden_size, hidden_size)
    w3, b3 = lin(ks[4], ks[5], hidden_size, 1)
    return {"w1": w1, "b1": b1, "w2": w2, "b2": b2, "w3": w3, "b3": b3}


if __name__ == "__main__":
    state_dim, action_dim, hidden_size = 8, 1, 128   # module default hidden=128
    batch, block_b = 256, 128                        # grid of 2 batch tiles

    key = jax.random.PRNGKey(0)
    k_param, k_state, k_action = jax.random.split(key, 3)

    params = init_params(k_param, state_dim, action_dim, hidden_size)
    states = jax.random.normal(k_state, (batch, state_dim), jnp.float32)
    actions = jax.random.normal(k_action, (batch, action_dim), jnp.float32)

    q = qnetwork_forward_batched(states, actions, params, block_b=block_b)
    jax.block_until_ready(q)

    # plain-JAX reference: PyTorch math applied row-wise
    x = jnp.concatenate([states, actions], axis=1)
    h1 = jnp.maximum(x @ params["w1"].T + params["b1"][:, 0], 0.0)
    h2 = jnp.maximum(h1 @ params["w2"].T + params["b2"][:, 0], 0.0)
    q_ref = h2 @ params["w3"].T + params["b3"][:, 0]          # (B, 1)

    assert q.shape == (batch, 1)
    assert jnp.allclose(q, q_ref, atol=1e-5), float(jnp.abs(q - q_ref).max())

    # ragged batch exercises the padding path
    q_odd = qnetwork_forward_batched(states[:200], actions[:200], params,
                                     block_b=block_b)
    jax.block_until_ready(q_odd)
    assert q_odd.shape == (200, 1)
    assert jnp.allclose(q_odd, q_ref[:200], atol=1e-5)

    # single-sample path (exact nn.Module semantics, (1,) output)
    q0 = qnetwork_forward(states[0], actions[0], params)
    jax.block_until_ready(q0)
    assert q0.shape == (1,)
    assert jnp.allclose(q0, q_ref[0], atol=1e-5)

    print("KERNEL_OK")
</pallas_src>

<mosaic_0001>
module attributes {stable_mosaic.version = 11 : i64} {
  func.func @_qnet_kernel(%arg0: i32, %arg1: memref<8x128xf32, #tpu.memory_space<vmem>>, %arg2: memref<1x128xf32, #tpu.memory_space<vmem>>, %arg3: memref<128x9xf32, #tpu.memory_space<vmem>>, %arg4: memref<128x1xf32, #tpu.memory_space<vmem>>, %arg5: memref<128x128xf32, #tpu.memory_space<vmem>>, %arg6: memref<128x1xf32, #tpu.memory_space<vmem>>, %arg7: memref<1x128xf32, #tpu.memory_space<vmem>>, %arg8: memref<1x1xf32, #tpu.memory_space<vmem>>, %arg9: memref<1x128xf32, #tpu.memory_space<vmem>>) attributes {dimension_semantics = [#tpu.dimension_semantics<parallel>], iteration_bounds = array<i64: 2>, scalar_prefetch = 0 : i64, scratch_operands = 0 : i64, tpu.core_type = #tpu.core_type<tc>, window_params = [{transform_indices = @transform_0, window_bounds = array<i64: 8, 128>}, {transform_indices = @transform_1, window_bounds = array<i64: 1, 128>}, {pipeline_mode = #tpu.pipeline_mode<synchronous>, transform_indices = @transform_2, window_bounds = array<i64: 128, 9>}, {pipeline_mode = #tpu.pipeline_mode<synchronous>, transform_indices = @transform_3, window_bounds = array<i64: 128, 1>}, {pipeline_mode = #tpu.pipeline_mode<synchronous>, transform_indices = @transform_4, window_bounds = array<i64: 128, 128>}, {pipeline_mode = #tpu.pipeline_mode<synchronous>, transform_indices = @transform_5, window_bounds = array<i64: 128, 1>}, {pipeline_mode = #tpu.pipeline_mode<synchronous>, transform_indices = @transform_6, window_bounds = array<i64: 1, 128>}, {pipeline_mode = #tpu.pipeline_mode<synchronous>, transform_indices = @transform_7, window_bounds = array<i64: 1, 1>}, {transform_indices = @transform_8, window_bounds = array<i64: 1, 128>}]} {
    %c0 = arith.constant 0 : index
    %c0_0 = arith.constant 0 : index
    %0 = vector.load %arg3[%c0, %c0_0] : memref<128x9xf32, #tpu.memory_space<vmem>>, vector<128x8xf32>
    %c0_1 = arith.constant 0 : index
    %c0_2 = arith.constant 0 : index
    %1 = vector.load %arg1[%c0_1, %c0_2] : memref<8x128xf32, #tpu.memory_space<vmem>>, vector<8x128xf32>
    %cst = arith.constant dense<0.000000e+00> : vector<128x128xf32>
    %2 = tpu.matmul %0, %1, %cst {dimension_numbers = #tpu.dot_dimension_numbers<[1], [0], [0], [1], [0, 0, 1, 1], [], []>} : vector<128x8xf32>, vector<8x128xf32>, vector<128x128xf32> -> vector<128x128xf32>
    %c0_3 = arith.constant 0 : index
    %c8 = arith.constant 8 : index
    %3 = vector.load %arg3[%c0_3, %c8] : memref<128x9xf32, #tpu.memory_space<vmem>>, vector<128x1xf32>
    %c0_4 = arith.constant 0 : index
    %c0_5 = arith.constant 0 : index
    %4 = vector.load %arg2[%c0_4, %c0_5] : memref<1x128xf32, #tpu.memory_space<vmem>>, vector<1x128xf32>
    %cst_6 = arith.constant dense<0.000000e+00> : vector<128x128xf32>
    %5 = tpu.matmul %3, %4, %cst_6 {dimension_numbers = #tpu.dot_dimension_numbers<[1], [0], [0], [1], [0, 0, 1, 1], [], []>} : vector<128x1xf32>, vector<1x128xf32>, vector<128x128xf32> -> vector<128x128xf32>
    %6 = arith.addf %2, %5 : vector<128x128xf32>
    %c0_7 = arith.constant 0 : index
    %c0_8 = arith.constant 0 : index
    %7 = vector.load %arg4[%c0_7, %c0_8] : memref<128x1xf32, #tpu.memory_space<vmem>>, vector<128x1xf32>
    %8 = vector.broadcast %7 : vector<128x1xf32> to vector<128x128xf32>
    %9 = arith.addf %6, %8 : vector<128x128xf32>
    %cst_9 = arith.constant 0.000000e+00 : f32
    %10 = vector.broadcast %cst_9 : f32 to vector<128x128xf32>
    %11 = arith.maximumf %9, %10 : vector<128x128xf32>
    %c0_10 = arith.constant 0 : index
    %c0_11 = arith.constant 0 : index
    %12 = vector.load %arg5[%c0_10, %c0_11] : memref<128x128xf32, #tpu.memory_space<vmem>>, vector<128x128xf32>
    %cst_12 = arith.constant dense<0.000000e+00> : vector<128x128xf32>
    %13 = tpu.matmul %12, %11, %cst_12 {dimension_numbers = #tpu.dot_dimension_numbers<[1], [0], [0], [1], [0, 0, 1, 1], [], []>} : vector<128x128xf32>, vector<128x128xf32>, vector<128x128xf32> -> vector<128x128xf32>
    %c0_13 = arith.constant 0 : index
    %c0_14 = arith.constant 0 : index
    %14 = vector.load %arg6[%c0_13, %c0_14] : memref<128x1xf32, #tpu.memory_space<vmem>>, vector<128x1xf32>
    %15 = vector.broadcast %14 : vector<128x1xf32> to vector<128x128xf32>
    %16 = arith.addf %13, %15 : vector<128x128xf32>
    %cst_15 = arith.constant 0.000000e+00 : f32
    %17 = vector.broadcast %cst_15 : f32 to vector<128x128xf32>
    %18 = arith.maximumf %16, %17 : vector<128x128xf32>
    %c0_16 = arith.constant 0 : index
    %c0_17 = arith.constant 0 : index
    %19 = vector.load %arg7[%c0_16, %c0_17] : memref<1x128xf32, #tpu.memory_space<vmem>>, vector<1x128xf32>
    %cst_18 = arith.constant dense<0.000000e+00> : vector<1x128xf32>
    %20 = tpu.matmul %19, %18, %cst_18 {dimension_numbers = #tpu.dot_dimension_numbers<[1], [0], [0], [1], [0, 0, 1, 1], [], []>} : vector<1x128xf32>, vector<128x128xf32>, vector<1x128xf32> -> vector<1x128xf32>
    %c0_19 = arith.constant 0 : index
    %c0_20 = arith.constant 0 : index
    %21 = vector.load %arg8[%c0_19, %c0_20] : memref<1x1xf32, #tpu.memory_space<vmem>>, vector<1x1xf32>
    %22 = vector.broadcast %21 : vector<1x1xf32> to vector<1x128xf32>
    %23 = arith.addf %20, %22 : vector<1x128xf32>
    %c0_21 = arith.constant 0 : index
    %c0_22 = arith.constant 0 : index
    %24 = vector.load %arg9[%c0_21, %c0_22] : memref<1x128xf32, #tpu.memory_space<vmem>>, vector<1x128xf32>
    tpu.vector_store %arg9[%c0_21, %c0_22], %23 {strides = array<i32>} : memref<1x128xf32, #tpu.memory_space<vmem>>, vector<1x128xf32>,
    return
  }
  func.func @transform_0(%arg0: i32) -> (i32, i32) {
    %c0_i32 = arith.constant 0 : i32
    %c0_i32_0 = arith.constant 0 : i32
    return %c0_i32, %arg0 : i32, i32
  }
  func.func @transform_1(%arg0: i32) -> (i32, i32) {
    %c0_i32 = arith.constant 0 : i32
    %c0_i32_0 = arith.constant 0 : i32
    return %c0_i32, %arg0 : i32, i32
  }
  func.func @transform_2(%arg0: i32) -> (i32, i32) {
    %c0_i32 = arith.constant 0 : i32
    %c0_i32_0 = arith.constant 0 : i32
    %c0_i32_1 = arith.constant 0 : i32
    return %c0_i32, %c0_i32_0 : i32, i32
  }
  func.func @transform_3(%arg0: i32) -> (i32, i32) {
    %c0_i32 = arith.constant 0 : i32
    %c0_i32_0 = arith.constant 0 : i32
    %c0_i32_1 = arith.constant 0 : i32
    return %c0_i32, %c0_i32_0 : i32, i32
  }
  func.func @transform_4(%arg0: i32) -> (i32, i32) {
    %c0_i32 = arith.constant 0 : i32
    %c0_i32_0 = arith.constant 0 : i32
    %c0_i32_1 = arith.constant 0 : i32
    return %c0_i32, %c0_i32_0 : i32, i32
  }
  func.func @transform_5(%arg0: i32) -> (i32, i32) {
    %c0_i32 = arith.constant 0 : i32
    %c0_i32_0 = arith.constant 0 : i32
    %c0_i32_1 = arith.constant 0 : i32
    return %c0_i32, %c0_i32_0 : i32, i32
  }
  func.func @transform_6(%arg0: i32) -> (i32, i32) {
    %c0_i32 = arith.constant 0 : i32
    %c0_i32_0 = arith.constant 0 : i32
    %c0_i32_1 = arith.constant 0 : i32
    return %c0_i32, %c0_i32_0 : i32, i32
  }
  func.func @transform_7(%arg0: i32) -> (i32, i32) {
    %c0_i32 = arith.constant 0 : i32
    %c0_i32_0 = arith.constant 0 : i32
    %c0_i32_1 = arith.constant 0 : i32
    return %c0_i32, %c0_i32_0 : i32, i32
  }
  func.func @transform_8(%arg0: i32) -> (i32, i32) {
    %c0_i32 = arith.constant 0 : i32
    %c0_i32_0 = arith.constant 0 : i32
    return %c0_i32, %arg0 : i32, i32
  }
}

</mosaic_0001>

<llo_original>
// kernel: tpu_custom_call.1
$region0: #{tpu_custom_call.1}
  #allocation0 [shape = 'u32[]', space=smem, size = 0x4, offset = 0x4, fixed_abs, tag = 'smem constant byte address 0x4 - core index']
  #allocation1 [shape = 'u32[144,128]{1,0:T(1,128)}', space=vmem, size = 0x12000, scoped, tag = 'internal scratch']
  #allocation2 [shape = 'f32[1,1]{1,0:T(1,128)S(1)}', space=vmem, size = 0x200, scoped, tag = 'scoped memory for tpu_custom_call.1']
  %s0 = inlined_call_operand.vmem [shape: f32[8,256], index: 0, kind: input, shape index: {}]
  %s1 = inlined_call_operand.vmem [shape: f32[1,256], index: 1, kind: input, shape index: {}]
  %s2 = inlined_call_operand.vmem [shape: f32[128,9], index: 2, kind: input, shape index: {}]
  %s3 = inlined_call_operand.vmem [shape: f32[128,1], index: 3, kind: input, shape index: {}]
  %s4 = inlined_call_operand.vmem [shape: f32[128,128], index: 4, kind: input, shape index: {}]
  %s5 = inlined_call_operand.vmem [shape: f32[128,1], index: 5, kind: input, shape index: {}]
  %s6 = inlined_call_operand.vmem [shape: f32[1,128], index: 6, kind: input, shape index: {}]
  %s7 = inlined_call_operand.<no memory space> [shape: f32[1,1], index: 7, kind: input, shape index: {}]
  %s8 = inlined_call_operand.hbm [shape: f32[1,256], index: 8, kind: output, shape index: {}]
  %s9 = sld [smem:[#allocation0]]
  $region65: #{tpu_custom_call.1} parent=0
    _
  %s11 = ssub.s32 1, %s9
  %s12 = scalar_select 0, %s11, %s9
  %v13 = vstv %s7
  %14 = vst [vmem:[#allocation2] sm:$0x1] %v13
  $region1: #{tpu_custom_call.1} parent=0
    #allocation3 [shape = 'u8[1024]{0}', space=vmem, size = 0x400, scoped, tag = 'output window, operand 0']
    #allocation4 [shape = 's32[2]{0}', space=sflag, size = 0x8, scoped, tag = 'scoped memory for tpu_custom_call.1']
    %15 = vsyncpa [#allocation4], 0
    %s16 = scalar_lea.sflag [#allocation4], 1
    %17 = vsyncpa %s16, 0
    loop: start=0, step=1, limit=4
    $region2: #{tpu_custom_call.1} parent=1 // loop_pre_header
      _
    $region3: #{tpu_custom_call.1} parent=1 // loop_header
      %s19 = sphi 0, %s23
      %p20 = scmp.ge.s32.totalorder %s19, 4
      %s29 = sphi 0, %s31
      %s32 = sphi 0, %s29
      %s33 = sphi 0, %s32
      %s49 = sphi 0, %s33
      %s55 = sphi 0, %s57
      %s58 = sphi 0, %s55
      %s59 = sphi 0, %s58
      %s75 = sphi 0, %s59
      %s79 = sphi 0, %s79
      %s81 = sphi 0, %s79
      %s82 = sphi 0, %s81
      %s96 = sphi 0, %s82
      %s100 = sphi 0, %s100
      %s102 = sphi 0, %s100
      %s103 = sphi 0, %s102
      %s117 = sphi 0, %s103
      %s121 = sphi 0, %s121
      %s123 = sphi 0, %s121
      %s124 = sphi 0, %s123
      %s138 = sphi 0, %s124
      %s142 = sphi 0, %s142
      %s144 = sphi 0, %s142
      %s145 = sphi 0, %s144
      %s159 = sphi 0, %s145
      %s163 = sphi 0, %s163
      %s165 = sphi 0, %s163
      %s166 = sphi 0, %s165
      %s180 = sphi 0, %s166
      %s184 = sphi 0, %s184
      %s186 = sphi 0, %s184
      %s187 = sphi 0, %s186
      %s201 = sphi 0, %s187
      %s207 = sphi 0, %s209
      %s210 = sphi 0, %s207
      %s211 = sphi 0, %s210
      %s227 = sphi 0, %s211
    $region4: #{tpu_custom_call.1} parent=1 // loop_header_branch
      %22 = sbr.rel (%p20) target = $region8
    $region5: #{tpu_custom_call.1} parent=1 // loop_body
      %s24 = ssub.s32 %s19, 1
      %s25 = ssub.s32 %s19, 2
      %s26 = sadd.s32 %s19, 1
      %s27 = ssub.s32 %s19, %s26
      %p28 = scmp.eq.s32.totalorder %s27, 0
      %s30 = sadd.s32 %s29, 1
      %s31 = scalar_select %p28, %s29, %s30
      %p34 = pneg %p28
      %p35 = scmp.eq.s32.totalorder %s19, 1
      %p36 = por %p34, %p35
      %p37 = scmp.ne.s32.totalorder %s29, %s32
      %p38 = scmp.eq.s32.totalorder %s19, 0
      %p39 = por %p37, %p38
      %p40 = scmp.ne.s32.totalorder %s29, %s32
      %p41 = scmp.eq.s32.totalorder %s24, 1
      %p42 = por %p40, %p41
      %p43 = scmp.ne.s32.totalorder %s32, %s33
      %p44 = scmp.eq.s32.totalorder %s24, 0
      %p45 = por %p43, %p44
      %p46 = scmp.ne.s32.totalorder %s32, %s33
      %p47 = scmp.eq.s32.totalorder %s25, 1
      %p48 = por %p46, %p47
      %p50 = scmp.ne.s32.totalorder %s33, %s49
      %p51 = scmp.eq.s32.totalorder %s25, 0
      %p52 = por %p50, %p51
      %s53 = ssub.s32 %s19, %s26
      %p54 = scmp.eq.s32.totalorder %s53, 0
      %s56 = sadd.s32 %s55, 1
      %s57 = scalar_select %p54, %s55, %s56
      %p60 = pneg %p54
      %p61 = scmp.eq.s32.totalorder %s19, 1
      %p62 = por %p60, %p61
      %p63 = scmp.ne.s32.totalorder %s55, %s58
      %p64 = scmp.eq.s32.totalorder %s19, 0
      %p65 = por %p63, %p64
      %p66 = scmp.ne.s32.totalorder %s55, %s58
      %p67 = scmp.eq.s32.totalorder %s24, 1
      %p68 = por %p66, %p67
      %p69 = scmp.ne.s32.totalorder %s58, %s59
      %p70 = scmp.eq.s32.totalorder %s24, 0
      %p71 = por %p69, %p70
      %p72 = scmp.ne.s32.totalorder %s58, %s59
      %p73 = scmp.eq.s32.totalorder %s25, 1
      %p74 = por %p72, %p73
      %p76 = scmp.ne.s32.totalorder %s59, %s75
      %p77 = scmp.eq.s32.totalorder %s25, 0
      %p78 = por %p76, %p77
      %s80 = sadd.s32 %s79, 1
      %p83 = scmp.eq.s32.totalorder %s19, 1
      %p84 = scmp.ne.s32.totalorder %s79, %s81
      %p85 = scmp.eq.s32.totalorder %s19, 0
      %p86 = por %p84, %p85
      %p87 = scmp.ne.s32.totalorder %s79, %s81
      %p88 = scmp.eq.s32.totalorder %s24, 1
      %p89 = por %p87, %p88
      %p90 = scmp.ne.s32.totalorder %s81, %s82
      %p91 = scmp.eq.s32.totalorder %s24, 0
      %p92 = por %p90, %p91
      %p93 = scmp.ne.s32.totalorder %s81, %s82
      %p94 = scmp.eq.s32.totalorder %s25, 1
      %p95 = por %p93, %p94
      %p97 = scmp.ne.s32.totalorder %s82, %s96
      %p98 = scmp.eq.s32.totalorder %s25, 0
      %p99 = por %p97, %p98
      %s101 = sadd.s32 %s100, 1
      %p104 = scmp.eq.s32.totalorder %s19, 1
      %p105 = scmp.ne.s32.totalorder %s100, %s102
      %p106 = scmp.eq.s32.totalorder %s19, 0
      %p107 = por %p105, %p106
      %p108 = scmp.ne.s32.totalorder %s100, %s102
      %p109 = scmp.eq.s32.totalorder %s24, 1
      %p110 = por %p108, %p109
      %p111 = scmp.ne.s32.totalorder %s102, %s103
      %p112 = scmp.eq.s32.totalorder %s24, 0
      %p113 = por %p111, %p112
      %p114 = scmp.ne.s32.totalorder %s102, %s103
      %p115 = scmp.eq.s32.totalorder %s25, 1
      %p116 = por %p114, %p115
      %p118 = scmp.ne.s32.totalorder %s103, %s117
      %p119 = scmp.eq.s32.totalorder %s25, 0
      %p120 = por %p118, %p119
      %s122 = sadd.s32 %s121, 1
      %p125 = scmp.eq.s32.totalorder %s19, 1
      %p126 = scmp.ne.s32.totalorder %s121, %s123
      %p127 = scmp.eq.s32.totalorder %s19, 0
      %p128 = por %p126, %p127
      %p129 = scmp.ne.s32.totalorder %s121, %s123
      %p130 = scmp.eq.s32.totalorder %s24, 1
      %p131 = por %p129, %p130
      %p132 = scmp.ne.s32.totalorder %s123, %s124
      %p133 = scmp.eq.s32.totalorder %s24, 0
      %p134 = por %p132, %p133
      %p135 = scmp.ne.s32.totalorder %s123, %s124
      %p136 = scmp.eq.s32.totalorder %s25, 1
      %p137 = por %p135, %p136
      %p139 = scmp.ne.s32.totalorder %s124, %s138
      %p140 = scmp.eq.s32.totalorder %s25, 0
      %p141 = por %p139, %p140
      %s143 = sadd.s32 %s142, 1
      %p146 = scmp.eq.s32.totalorder %s19, 1
      %p147 = scmp.ne.s32.totalorder %s142, %s144
      %p148 = scmp.eq.s32.totalorder %s19, 0
      %p149 = por %p147, %p148
      %p150 = scmp.ne.s32.totalorder %s142, %s144
      %p151 = scmp.eq.s32.totalorder %s24, 1
      %p152 = por %p150, %p151
      %p153 = scmp.ne.s32.totalorder %s144, %s145
      %p154 = scmp.eq.s32.totalorder %s24, 0
      %p155 = por %p153, %p154
      %p156 = scmp.ne.s32.totalorder %s144, %s145
      %p157 = scmp.eq.s32.totalorder %s25, 1
      %p158 = por %p156, %p157
      %p160 = scmp.ne.s32.totalorder %s145, %s159
      %p161 = scmp.eq.s32.totalorder %s25, 0
      %p162 = por %p160, %p161
      %s164 = sadd.s32 %s163, 1
      %p167 = scmp.eq.s32.totalorder %s19, 1
      %p168 = scmp.ne.s32.totalorder %s163, %s165
      %p169 = scmp.eq.s32.totalorder %s19, 0
      %p170 = por %p168, %p169
      %p171 = scmp.ne.s32.totalorder %s163, %s165
      %p172 = scmp.eq.s32.totalorder %s24, 1
      %p173 = por %p171, %p172
      %p174 = scmp.ne.s32.totalorder %s165, %s166
      %p175 = scmp.eq.s32.totalorder %s24, 0
      %p176 = por %p174, %p175
      %p177 = scmp.ne.s32.totalorder %s165, %s166
      %p178 = scmp.eq.s32.totalorder %s25, 1
      %p179 = por %p177, %p178
      %p181 = scmp.ne.s32.totalorder %s166, %s180
      %p182 = scmp.eq.s32.totalorder %s25, 0
      %p183 = por %p181, %p182
      %s185 = sadd.s32 %s184, 1
      %p188 = scmp.eq.s32.totalorder %s19, 1
      %p189 = scmp.ne.s32.totalorder %s184, %s186
      %p190 = scmp.eq.s32.totalorder %s19, 0
      %p191 = por %p189, %p190
      %p192 = scmp.ne.s32.totalorder %s184, %s186
      %p193 = scmp.eq.s32.totalorder %s24, 1
      %p194 = por %p192, %p193
      %p195 = scmp.ne.s32.totalorder %s186, %s187
      %p196 = scmp.eq.s32.totalorder %s24, 0
      %p197 = por %p195, %p196
      %p198 = scmp.ne.s32.totalorder %s186, %s187
      %p199 = scmp.eq.s32.totalorder %s25, 1
      %p200 = por %p198, %p199
      %p202 = scmp.ne.s32.totalorder %s187, %s201
      %p203 = scmp.eq.s32.totalorder %s25, 0
      %p204 = por %p202, %p203
      %s205 = ssub.s32 %s19, %s26
      %p206 = scmp.eq.s32.totalorder %s205, 0
      %s208 = sadd.s32 %s207, 1
      %s209 = scalar_select %p206, %s207, %s208
      %p212 = pneg %p206
      %p213 = scmp.eq.s32.totalorder %s19, 1
      %p214 = por %p212, %p213
      %p215 = scmp.ne.s32.totalorder %s207, %s210
      %p216 = scmp.eq.s32.totalorder %s19, 0
      %p217 = por %p215, %p216
      %p218 = scmp.ne.s32.totalorder %s207, %s210
      %p219 = scmp.eq.s32.totalorder %s24, 1
      %p220 = por %p218, %p219
      %p221 = scmp.ne.s32.totalorder %s210, %s211
      %p222 = scmp.eq.s32.totalorder %s24, 0
      %p223 = por %p221, %p222
      %p224 = scmp.ne.s32.totalorder %s210, %s211
      %p225 = scmp.eq.s32.totalorder %s25, 1
      %p226 = por %p224, %p225
      %p228 = scmp.ne.s32.totalorder %s211, %s227
      %p229 = scmp.eq.s32.totalorder %s25, 0
      %p230 = por %p228, %p229
      %p231 = scmp.le.s32.totalorder 1, %s19
      %p232 = scmp.lt.s32.totalorder %s19, 3
      %p233 = pnand %p231, %p232
      %p234 = pneg %p233
      // Predicated region
      $region9: #{tpu_custom_call.1} parent=5 // pred_check
        _
      $region10: #{tpu_custom_call.1} parent=5 // pred_check_branch
        %236 = sbr.rel (%p233) target = $region12
      $region11: #{tpu_custom_call.1} parent=5 // pred_region
        %s237 = ssub.s32 %s19, 1
        // Predicated region
        $region13: #{tpu_custom_call.1} parent=11 // pred_check
          %p238 = pneg %p92
        $region14: #{tpu_custom_call.1} parent=11 // pred_check_branch
          %240 = sbr.rel (%p238) target = $region16
        $region15: #{tpu_custom_call.1} parent=11 // pred_region
          _
        $region16: #{tpu_custom_call.1} parent=11 // pred_fallthru
          _
        // Predicated region
        $region17: #{tpu_custom_call.1} parent=11 // pred_check
          %p241 = pneg %p113
        $region18: #{tpu_custom_call.1} parent=11 // pred_check_branch
          %243 = sbr.rel (%p241) target = $region20
        $region19: #{tpu_custom_call.1} parent=11 // pred_region
          _
        $region20: #{tpu_custom_call.1} parent=11 // pred_fallthru
          _
        // Predicated region
        $region21: #{tpu_custom_call.1} parent=11 // pred_check
          %p244 = pneg %p134
        $region22: #{tpu_custom_call.1} parent=11 // pred_check_branch
          %246 = sbr.rel (%p244) target = $region24
        $region23: #{tpu_custom_call.1} parent=11 // pred_region
          _
        $region24: #{tpu_custom_call.1} parent=11 // pred_fallthru
          _
        // Predicated region
        $region25: #{tpu_custom_call.1} parent=11 // pred_check
          %p247 = pneg %p155
        $region26: #{tpu_custom_call.1} parent=11 // pred_check_branch
          %249 = sbr.rel (%p247) target = $region28
        $region27: #{tpu_custom_call.1} parent=11 // pred_region
          _
        $region28: #{tpu_custom_call.1} parent=11 // pred_fallthru
          _
        // Predicated region
        $region29: #{tpu_custom_call.1} parent=11 // pred_check
          %p250 = pneg %p176
        $region30: #{tpu_custom_call.1} parent=11 // pred_check_branch
          %252 = sbr.rel (%p250) target = $region32
        $region31: #{tpu_custom_call.1} parent=11 // pred_region
          _
        $region32: #{tpu_custom_call.1} parent=11 // pred_fallthru
          _
        // Predicated region
        $region33: #{tpu_custom_call.1} parent=11 // pred_check
          %p253 = pneg %p197
        $region34: #{tpu_custom_call.1} parent=11 // pred_check_branch
          %255 = sbr.rel (%p253) target = $region36
        $region35: #{tpu_custom_call.1} parent=11 // pred_region
          _
        $region36: #{tpu_custom_call.1} parent=11 // pred_fallthru
          _
      $region12: #{tpu_custom_call.1} parent=5 // pred_fallthru
        _
      %p256 = scmp.lt.s32.totalorder %s19, 2
      // Predicated region
      $region37: #{tpu_custom_call.1} parent=5 // pred_check
        %p257 = pneg %p256
      $region38: #{tpu_custom_call.1} parent=5 // pred_check_branch
        %259 = sbr.rel (%p257) target = $region40
      $region39: #{tpu_custom_call.1} parent=5 // pred_region
        // Predicated region
        $region41: #{tpu_custom_call.1} parent=39 // pred_check
          %p260 = pneg %p39
        $region42: #{tpu_custom_call.1} parent=39 // pred_check_branch
          %262 = sbr.rel (%p260) target = $region44
        $region43: #{tpu_custom_call.1} parent=39 // pred_region
          %p263 = scmp.lt.s32.totalorder %s19, 1
          %s264 = scalar_select %p263, %s19, 1
          %s265 = smul.addr %s264, 8
          %s266 = scalar_lea.vmem %s0, %s265
        $region44: #{tpu_custom_call.1} parent=39 // pred_fallthru
          _
        // Predicated region
        $region45: #{tpu_custom_call.1} parent=39 // pred_check
          %p267 = pneg %p65
        $region46: #{tpu_custom_call.1} parent=39 // pred_check_branch
          %269 = sbr.rel (%p267) target = $region48
        $region47: #{tpu_custom_call.1} parent=39 // pred_region
          %p270 = scmp.lt.s32.totalorder %s19, 1
          %s271 = scalar_select %p270, %s19, 1
          %s272 = scalar_lea.vmem %s1, %s271
        $region48: #{tpu_custom_call.1} parent=39 // pred_fallthru
          _
      $region40: #{tpu_custom_call.1} parent=5 // pred_fallthru
        _
      %p273 = scmp.le.s32.totalorder 1, %s19
      %p274 = scmp.lt.s32.totalorder %s19, 3
      %p275 = pnand %p273, %p274
      %p276 = pneg %p275
      // Predicated region
      $region49: #{tpu_custom_call.1} parent=5 // pred_check
        _
      $region50: #{tpu_custom_call.1} parent=5 // pred_check_branch
        %278 = sbr.rel (%p275) target = $region52
      $region51: #{tpu_custom_call.1} parent=5 // pred_region
        %s279 = ssub.s32 %s19, 1
        %p280 = scmp.lt.s32.totalorder %s24, 1
        %s281 = scalar_select %p280, %s24, 1
        %s282 = smul.addr %s281, 8
        %s283 = scalar_lea.vmem %s0, %s282
        %p284 = pneg %p45
        %p285 = pneg %p42
        %p286 = scmp.lt.s32.totalorder %s24, 1
        %s287 = scalar_select %p286, %s24, 1
        %s288 = scalar_lea.vmem %s1, %s287
        %p289 = pneg %p71
        %p290 = pneg %p68
        %p291 = pneg %p92
        %p292 = pneg %p89
        %p293 = pneg %p113
        %p294 = pneg %p110
        %p295 = pneg %p134
        %p296 = pneg %p131
        %p297 = pneg %p155
        %p298 = pneg %p152
        %p299 = pneg %p176
        %p300 = pneg %p173
        %p301 = pneg %p197
        %p302 = pneg %p194
        %p303 = pneg %p223
        %p304 = pneg %p220
        %s305 = sand.u32 %s210, 1
        %s306 = scalar_lea.sflag [#allocation4], %s305
        %s307 = sand.u32 %s210, 1
        %s308 = scalar_lea.vmem [#allocation3], %s307
        %p309 = scmp.lt.s32.totalorder %s24, 1
        %s310 = scalar_select %p309, %s24, 1
        %s311 = smul.addr %s310, 8
        %s312 = scalar_lea.vmem %s0, %s311
        %p313 = scmp.lt.s32.totalorder %s24, 1
        %s314 = scalar_select %p313, %s24, 1
        %s315 = scalar_lea.vmem %s1, %s314
        %v316 = vld [vmem:[%s2] sm:$0xff]
        %v317 = vld [vmem:[%s2 + $0x8] sm:$0xff]
        %v318 = vld [vmem:[%s2 + $0x10] sm:$0xff]
        %v319 = vld [vmem:[%s2 + $0x18] sm:$0xff]
        %v320 = vld [vmem:[%s2 + $0x20] sm:$0xff]
        %v321 = vld [vmem:[%s2 + $0x28] sm:$0xff]
        %v322 = vld [vmem:[%s2 + $0x30] sm:$0xff]
        %v323 = vld [vmem:[%s2 + $0x38] sm:$0xff]
        %v324 = vld [vmem:[%s2 + $0x40] sm:$0xff]
        %v325 = vld [vmem:[%s2 + $0x48] sm:$0xff]
        %v326 = vld [vmem:[%s2 + $0x50] sm:$0xff]
        %v327 = vld [vmem:[%s2 + $0x58] sm:$0xff]
        %v328 = vld [vmem:[%s2 + $0x60] sm:$0xff]
        %v329 = vld [vmem:[%s2 + $0x68] sm:$0xff]
        %v330 = vld [vmem:[%s2 + $0x70] sm:$0xff]
        %v331 = vld [vmem:[%s2 + $0x78] sm:$0xff]
        %v332 = vld [vmem:[%s312] sm:$0xff]
        %v333 = vld [vmem:[%s315] sm:$0x1]
        %350 = vrot.lane.b32.xlu0 %v316, 120
        %v351 = vpop.permute.xlu0 %350
        %352 = vrot.lane.b32.xlu0 %v317, 120
        %v353 = vpop.permute.xlu0 %352
        %354 = vrot.lane.b32.xlu0 %v318, 120
        %v355 = vpop.permute.xlu0 %354
        %356 = vrot.lane.b32.xlu0 %v319, 120
        %v357 = vpop.permute.xlu0 %356
        %358 = vrot.lane.b32.xlu0 %v320, 120
        %v359 = vpop.permute.xlu0 %358
        %360 = vrot.lane.b32.xlu0 %v321, 120
        %v361 = vpop.permute.xlu0 %360
        %362 = vrot.lane.b32.xlu0 %v322, 120
        %v363 = vpop.permute.xlu0 %362
        %364 = vrot.lane.b32.xlu0 %v323, 120
        %v365 = vpop.permute.xlu0 %364
        %366 = vrot.lane.b32.xlu0 %v324, 120
        %v367 = vpop.permute.xlu0 %366
        %368 = vrot.lane.b32.xlu0 %v325, 120
        %v369 = vpop.permute.xlu0 %368
        %370 = vrot.lane.b32.xlu0 %v326, 120
        %v371 = vpop.permute.xlu0 %370
        %372 = vrot.lane.b32.xlu0 %v327, 120
        %v373 = vpop.permute.xlu0 %372
        %374 = vrot.lane.b32.xlu0 %v328, 120
        %v375 = vpop.permute.xlu0 %374
        %376 = vrot.lane.b32.xlu0 %v329, 120
        %v377 = vpop.permute.xlu0 %376
        %378 = vrot.lane.b32.xlu0 %v330, 120
        %v379 = vpop.permute.xlu0 %378
        %380 = vrot.lane.b32.xlu0 %v331, 120
        %v381 = vpop.permute.xlu0 %380
        %vm382 = vcmask 7168
        %v383 = vsel %vm382, %v351, 0
        %v385 = vsel %vm382, %v353, 0
        %v387 = vsel %vm382, %v355, 0
        %v389 = vsel %vm382, %v357, 0
        %v391 = vsel %vm382, %v359, 0
        %v393 = vsel %vm382, %v361, 0
        %v395 = vsel %vm382, %v363, 0
        %v397 = vsel %vm382, %v365, 0
        %v399 = vsel %vm382, %v367, 0
        %v401 = vsel %vm382, %v369, 0
        %v403 = vsel %vm382, %v371, 0
        %v405 = vsel %vm382, %v373, 0
        %v407 = vsel %vm382, %v375, 0
        %v409 = vsel %vm382, %v377, 0
        %v411 = vsel %vm382, %v379, 0
        %v413 = vsel %vm382, %v381, 0
        %vm415 = vcmask 1040384
        %v417 = vsel %vm415, %v333, 0
        %419 = vmatprep.subr.mxu0 0.0
        %420 = vmatpush1.msra.mxu0 %v417
        %421 = vmatprep.subr.mxu0 0.0
        %422 = vmatpush1.msra.mxu0 0.0
        %423 = vmatprep.subr.mxu0 0.0
        %424 = vmatpush1.msra.mxu0 0.0
        %425 = vmatprep.subr.mxu0 0.0
        %426 = vmatpush1.msra.mxu0 0.0
        %427 = vmatprep.subr.mxu0 0.0
        %428 = vmatpush1.msra.mxu0 0.0
        %429 = vmatprep.subr.mxu0 0.0
        %430 = vmatpush1.msra.mxu0 0.0
        %431 = vmatprep.subr.mxu0 0.0
        %432 = vmatpush1.msra.mxu0 0.0
        %433 = vmatprep.subr.mxu0 0.0
        %434 = vmatpush1.msra.mxu0 0.0
        %435 = vmatprep.subr.mxu0 0.0
        %436 = vmatpush1.msra.mxu0 0.0
        %437 = vmatprep.subr.mxu0 0.0
        %438 = vmatpush1.msra.mxu0 0.0
        %439 = vmatprep.subr.mxu0 0.0
        %440 = vmatpush1.msra.mxu0 0.0
        %441 = vmatprep.subr.mxu0 0.0
        %442 = vmatpush1.msra.mxu0 0.0
        %443 = vmatprep.subr.mxu0 0.0
        %444 = vmatpush1.msra.mxu0 0.0
        %445 = vmatprep.subr.mxu0 0.0
        %446 = vmatpush1.msra.mxu0 0.0
        %447 = vmatprep.subr.mxu0 0.0
        %448 = vmatpush1.msra.mxu0 0.0
        %449 = vmatprep.subr.mxu0 0.0
        %450 = vmatpush1.msra.mxu0 0.0
        %451 = vmatprep.subr.mxu0 0.0
        %452 = vmatpush1.msra.mxu0 0.0
        %453 = vmatprep.subr.mxu0 0.0
        %454 = vmatpush1.msra.mxu0 0.0
        %455 = vmatprep.subr.mxu0 0.0
        %456 = vmatpush1.msra.mxu0 0.0
        %457 = vmatprep.subr.mxu0 0.0
        %458 = vmatpush1.msra.mxu0 0.0
        %459 = vmatprep.subr.mxu0 0.0
        %460 = vmatpush1.msra.mxu0 0.0
        %461 = vmatprep.subr.mxu0 0.0
        %462 = vmatpush1.msra.mxu0 0.0
        %463 = vmatprep.subr.mxu0 0.0
        %464 = vmatpush1.msra.mxu0 0.0
        %465 = vmatprep.subr.mxu0 0.0
        %466 = vmatpush1.msra.mxu0 0.0
        %467 = vmatprep.subr.mxu0 0.0
        %468 = vmatpush1.msra.mxu0 0.0
        %469 = vmatprep.subr.mxu0 0.0
        %470 = vmatpush1.msra.mxu0 0.0
        %471 = vmatprep.subr.mxu0 0.0
        %472 = vmatpush1.msra.mxu0 0.0
        %473 = vmatprep.subr.mxu0 0.0
        %474 = vmatpush1.msra.mxu0 0.0
        %475 = vmatprep.subr.mxu0 0.0
        %476 = vmatpush1.msra.mxu0 0.0
        %477 = vmatprep.subr.mxu0 0.0
        %478 = vmatpush1.msra.mxu0 0.0
        %479 = vmatprep.subr.mxu0 0.0
        %480 = vmatpush1.msra.mxu0 0.0
        %481 = vmatprep.subr.mxu0 0.0
        %482 = vmatpush1.msra.mxu0 0.0
        %483 = vmatprep.mubr.f32.mxu0 0.0
        %484 = vmatmul.mubr.f32.gmra.mrb[0].mxu0 %v383
        %v485 = vpop.f32.mrb[0].mxu0
        %v486 = vadd.f32 0.0, %v485
        %v487 = vpop.f32.mrb[0].mxu0
        %488 = vmatprep.mubr.f32.mxu0 0.0
        %489 = vmatmul.mubr.f32.gmra.mrb[0].mxu0 %v385
        %v490 = vpop.f32.mrb[0].mxu0
        %v491 = vadd.f32 0.0, %v490
        %v492 = vpop.f32.mrb[0].mxu0
        %493 = vmatprep.mubr.f32.mxu0 0.0
        %494 = vmatmul.mubr.f32.gmra.mrb[0].mxu0 %v387
        %v495 = vpop.f32.mrb[0].mxu0
        %v496 = vadd.f32 0.0, %v495
        %v497 = vpop.f32.mrb[0].mxu0
        %498 = vmatprep.mubr.f32.mxu0 0.0
        %499 = vmatmul.mubr.f32.gmra.mrb[0].mxu0 %v389
        %v500 = vpop.f32.mrb[0].mxu0
        %v501 = vadd.f32 0.0, %v500
        %v502 = vpop.f32.mrb[0].mxu0
        %503 = vmatprep.mubr.f32.mxu0 0.0
        %504 = vmatmul.mubr.f32.gmra.mrb[0].mxu0 %v391
        %v505 = vpop.f32.mrb[0].mxu0
        %v506 = vadd.f32 0.0, %v505
        %v507 = vpop.f32.mrb[0].mxu0
        %508 = vmatprep.mubr.f32.mxu0 0.0
        %509 = vmatmul.mubr.f32.gmra.mrb[0].mxu0 %v393
        %v510 = vpop.f32.mrb[0].mxu0
        %v511 = vadd.f32 0.0, %v510
        %v512 = vpop.f32.mrb[0].mxu0
        %513 = vmatprep.mubr.f32.mxu0 0.0
        %514 = vmatmul.mubr.f32.gmra.mrb[0].mxu0 %v395
        %v515 = vpop.f32.mrb[0].mxu0
        %v516 = vadd.f32 0.0, %v515
        %v517 = vpop.f32.mrb[0].mxu0
        %518 = vmatprep.mubr.f32.mxu0 0.0
        %519 = vmatmul.mubr.f32.gmra.mrb[0].mxu0 %v397
        %v520 = vpop.f32.mrb[0].mxu0
        %v521 = vadd.f32 0.0, %v520
        %v522 = vpop.f32.mrb[0].mxu0
        %523 = vmatprep.mubr.f32.mxu0 0.0
        %524 = vmatmul.mubr.f32.gmra.mrb[0].mxu0 %v399
        %v525 = vpop.f32.mrb[0].mxu0
        %v526 = vadd.f32 0.0, %v525
        %v527 = vpop.f32.mrb[0].mxu0
        %528 = vmatprep.mubr.f32.mxu0 0.0
        %529 = vmatmul.mubr.f32.gmra.mrb[0].mxu0 %v401
        %v530 = vpop.f32.mrb[0].mxu0
        %v531 = vadd.f32 0.0, %v530
        %v532 = vpop.f32.mrb[0].mxu0
        %533 = vmatprep.mubr.f32.mxu0 0.0
        %534 = vmatmul.mubr.f32.gmra.mrb[0].mxu0 %v403
        %v535 = vpop.f32.mrb[0].mxu0
        %v536 = vadd.f32 0.0, %v535
        %v537 = vpop.f32.mrb[0].mxu0
        %538 = vmatprep.mubr.f32.mxu0 0.0
        %539 = vmatmul.mubr.f32.gmra.mrb[0].mxu0 %v405
        %v540 = vpop.f32.mrb[0].mxu0
        %v541 = vadd.f32 0.0, %v540
        %v542 = vpop.f32.mrb[0].mxu0
        %543 = vmatprep.mubr.f32.mxu0 0.0
        %544 = vmatmul.mubr.f32.gmra.mrb[0].mxu0 %v407
        %v545 = vpop.f32.mrb[0].mxu0
        %v546 = vadd.f32 0.0, %v545
        %v547 = vpop.f32.mrb[0].mxu0
        %548 = vmatprep.mubr.f32.mxu0 0.0
        %549 = vmatmul.mubr.f32.gmra.mrb[0].mxu0 %v409
        %v550 = vpop.f32.mrb[0].mxu0
        %v551 = vadd.f32 0.0, %v550
        %v552 = vpop.f32.mrb[0].mxu0
        %553 = vmatprep.mubr.f32.mxu0 0.0
        %554 = vmatmul.mubr.f32.gmra.mrb[0].mxu0 %v411
        %v555 = vpop.f32.mrb[0].mxu0
        %v556 = vadd.f32 0.0, %v555
        %v557 = vpop.f32.mrb[0].mxu0
        %558 = vmatprep.mubr.f32.mxu0 0.0
        %559 = vmatmul.mubr.f32.gmra.mrb[0].mxu0 %v413
        %v560 = vpop.f32.mrb[0].mxu0
        %v561 = vadd.f32 0.0, %v560
        %v562 = vpop.f32.mrb[0].mxu0
        %563 = vdwg.mxu0
        %vm564 = vcmask 64512
        %v565 = vsel %vm564, %v316, 0
        %v567 = vsel %vm564, %v317, 0
        %v569 = vsel %vm564, %v318, 0
        %v571 = vsel %vm564, %v319, 0
        %v573 = vsel %vm564, %v320, 0
        %v575 = vsel %vm564, %v321, 0
        %v577 = vsel %vm564, %v322, 0
        %v579 = vsel %vm564, %v323, 0
        %v581 = vsel %vm564, %v324, 0
        %v583 = vsel %vm564, %v325, 0
        %v585 = vsel %vm564, %v326, 0
        %v587 = vsel %vm564, %v327, 0
        %v589 = vsel %vm564, %v328, 0
        %v591 = vsel %vm564, %v329, 0
        %v593 = vsel %vm564, %v330, 0
        %v595 = vsel %vm564, %v331, 0
        %597 = vmatprep.subr.mxu0 0.0
        %598 = vmatpush1.msra.mxu0 %v332
        %599 = vmatprep.subr.mxu0 0.0
        %600 = vmatpush1.msra.mxu0 0.0
        %601 = vmatprep.subr.mxu0 0.0
        %602 = vmatpush1.msra.mxu0 0.0
        %603 = vmatprep.subr.mxu0 0.0
        %604 = vmatpush1.msra.mxu0 0.0
        %605 = vmatprep.subr.mxu0 0.0
        %606 = vmatpush1.msra.mxu0 0.0
        %607 = vmatprep.subr.mxu0 0.0
        %608 = vmatpush1.msra.mxu0 0.0
        %609 = vmatprep.subr.mxu0 0.0
        %610 = vmatpush1.msra.mxu0 0.0
        %611 = vmatprep.subr.mxu0 0.0
        %612 = vmatpush1.msra.mxu0 0.0
        %613 = vmatprep.subr.mxu0 0.0
        %614 = vmatpush1.msra.mxu0 0.0
        %615 = vmatprep.subr.mxu0 0.0
        %616 = vmatpush1.msra.mxu0 0.0
        %617 = vmatprep.subr.mxu0 0.0
        %618 = vmatpush1.msra.mxu0 0.0
        %619 = vmatprep.subr.mxu0 0.0
        %620 = vmatpush1.msra.mxu0 0.0
        %621 = vmatprep.subr.mxu0 0.0
        %622 = vmatpush1.msra.mxu0 0.0
        %623 = vmatprep.subr.mxu0 0.0
        %624 = vmatpush1.msra.mxu0 0.0
        %625 = vmatprep.subr.mxu0 0.0
        %626 = vmatpush1.msra.mxu0 0.0
        %627 = vmatprep.subr.mxu0 0.0
        %628 = vmatpush1.msra.mxu0 0.0
        %629 = vmatprep.subr.mxu0 0.0
        %630 = vmatpush1.msra.mxu0 0.0
        %631 = vmatprep.subr.mxu0 0.0
        %632 = vmatpush1.msra.mxu0 0.0
        %633 = vmatprep.subr.mxu0 0.0
        %634 = vmatpush1.msra.mxu0 0.0
        %635 = vmatprep.subr.mxu0 0.0
        %636 = vmatpush1.msra.mxu0 0.0
        %637 = vmatprep.subr.mxu0 0.0
        %638 = vmatpush1.msra.mxu0 0.0
        %639 = vmatprep.subr.mxu0 0.0
        %640 = vmatpush1.msra.mxu0 0.0
        %641 = vmatprep.subr.mxu0 0.0
        %642 = vmatpush1.msra.mxu0 0.0
        %643 = vmatprep.subr.mxu0 0.0
        %644 = vmatpush1.msra.mxu0 0.0
        %645 = vmatprep.subr.mxu0 0.0
        %646 = vmatpush1.msra.mxu0 0.0
        %647 = vmatprep.subr.mxu0 0.0
        %648 = vmatpush1.msra.mxu0 0.0
        %649 = vmatprep.subr.mxu0 0.0
        %650 = vmatpush1.msra.mxu0 0.0
        %651 = vmatprep.subr.mxu0 0.0
        %652 = vmatpush1.msra.mxu0 0.0
        %653 = vmatprep.subr.mxu0 0.0
        %654 = vmatpush1.msra.mxu0 0.0
        %655 = vmatprep.subr.mxu0 0.0
        %656 = vmatpush1.msra.mxu0 0.0
        %657 = vmatprep.subr.mxu0 0.0
        %658 = vmatpush1.msra.mxu0 0.0
        %659 = vmatprep.subr.mxu0 0.0
        %660 = vmatpush1.msra.mxu0 0.0
        %661 = vmatprep.mubr.f32.mxu0 0.0
        %662 = vmatmul.mubr.f32.gmra.mrb[0].mxu0 %v565
        %v663 = vpop.f32.mrb[0].mxu0
        %v664 = vadd.f32 %v486, %v663
        %v665 = vpop.f32.mrb[0].mxu0
        %666 = vmatprep.mubr.f32.mxu0 0.0
        %667 = vmatmul.mubr.f32.gmra.mrb[0].mxu0 %v567
        %v668 = vpop.f32.mrb[0].mxu0
        %v669 = vadd.f32 %v491, %v668
        %v670 = vpop.f32.mrb[0].mxu0
        %671 = vmatprep.mubr.f32.mxu0 0.0
        %672 = vmatmul.mubr.f32.gmra.mrb[0].mxu0 %v569
        %v673 = vpop.f32.mrb[0].mxu0
        %v674 = vadd.f32 %v496, %v673
        %v675 = vpop.f32.mrb[0].mxu0
        %676 = vmatprep.mubr.f32.mxu0 0.0
        %677 = vmatmul.mubr.f32.gmra.mrb[0].mxu0 %v571
        %v678 = vpop.f32.mrb[0].mxu0
        %v679 = vadd.f32 %v501, %v678
        %v680 = vpop.f32.mrb[0].mxu0
        %681 = vmatprep.mubr.f32.mxu0 0.0
        %682 = vmatmul.mubr.f32.gmra.mrb[0].mxu0 %v573
        %v683 = vpop.f32.mrb[0].mxu0
        %v684 = vadd.f32 %v506, %v683
        %v685 = vpop.f32.mrb[0].mxu0
        %686 = vmatprep.mubr.f32.mxu0 0.0
        %687 = vmatmul.mubr.f32.gmra.mrb[0].mxu0 %v575
        %v688 = vpop.f32.mrb[0].mxu0
        %v689 = vadd.f32 %v511, %v688
        %v690 = vpop.f32.mrb[0].mxu0
        %691 = vmatprep.mubr.f32.mxu0 0.0
        %692 = vmatmul.mubr.f32.gmra.mrb[0].mxu0 %v577
        %v693 = vpop.f32.mrb[0].mxu0
        %v694 = vadd.f32 %v516, %v693
        %v695 = vpop.f32.mrb[0].mxu0
        %696 = vmatprep.mubr.f32.mxu0 0.0
        %697 = vmatmul.mubr.f32.gmra.mrb[0].mxu0 %v579
        %v698 = vpop.f32.mrb[0].mxu0
        %v699 = vadd.f32 %v521, %v698
        %v700 = vpop.f32.mrb[0].mxu0
        %701 = vmatprep.mubr.f32.mxu0 0.0
        %702 = vmatmul.mubr.f32.gmra.mrb[0].mxu0 %v581
        %v703 = vpop.f32.mrb[0].mxu0
        %v704 = vadd.f32 %v526, %v703
        %v705 = vpop.f32.mrb[0].mxu0
        %706 = vmatprep.mubr.f32.mxu0 0.0
        %707 = vmatmul.mubr.f32.gmra.mrb[0].mxu0 %v583
        %v708 = vpop.f32.mrb[0].mxu0
        %v709 = vadd.f32 %v531, %v708
        %v710 = vpop.f32.mrb[0].mxu0
        %711 = vmatprep.mubr.f32.mxu0 0.0
        %712 = vmatmul.mubr.f32.gmra.mrb[0].mxu0 %v585
        %v713 = vpop.f32.mrb[0].mxu0
        %v714 = vadd.f32 %v536, %v713
        %v715 = vpop.f32.mrb[0].mxu0
        %716 = vmatprep.mubr.f32.mxu0 0.0
        %717 = vmatmul.mubr.f32.gmra.mrb[0].mxu0 %v587
        %v718 = vpop.f32.mrb[0].mxu0
        %v719 = vadd.f32 %v541, %v718
        %v720 = vpop.f32.mrb[0].mxu0
        %721 = vmatprep.mubr.f32.mxu0 0.0
        %722 = vmatmul.mubr.f32.gmra.mrb[0].mxu0 %v589
        %v723 = vpop.f32.mrb[0].mxu0
        %v724 = vadd.f32 %v546, %v723
        %v725 = vpop.f32.mrb[0].mxu0
        %726 = vmatprep.mubr.f32.mxu0 0.0
        %727 = vmatmul.mubr.f32.gmra.mrb[0].mxu0 %v591
        %v728 = vpop.f32.mrb[0].mxu0
        %v729 = vadd.f32 %v551, %v728
        %v730 = vpop.f32.mrb[0].mxu0
        %731 = vmatprep.mubr.f32.mxu0 0.0
        %732 = vmatmul.mubr.f32.gmra.mrb[0].mxu0 %v593
        %v733 = vpop.f32.mrb[0].mxu0
        %v734 = vadd.f32 %v556, %v733
        %v735 = vpop.f32.mrb[0].mxu0
        %736 = vmatprep.mubr.f32.mxu0 0.0
        %737 = vmatmul.mubr.f32.gmra.mrb[0].mxu0 %v595
        %v738 = vpop.f32.mrb[0].mxu0
        %v739 = vadd.f32 %v561, %v738
        %v740 = vpop.f32.mrb[0].mxu0
        %741 = vdwg.mxu0
        %v742 = vld [vmem:[%s3] sm:$0xff]
        %v743 = vld [vmem:[%s3 + $0x8] sm:$0xff]
        %v744 = vld [vmem:[%s3 + $0x10] sm:$0xff]
        %v745 = vld [vmem:[%s3 + $0x18] sm:$0xff]
        %v746 = vld [vmem:[%s3 + $0x20] sm:$0xff]
        %v747 = vld [vmem:[%s3 + $0x28] sm:$0xff]
        %v748 = vld [vmem:[%s3 + $0x30] sm:$0xff]
        %v749 = vld [vmem:[%s3 + $0x38] sm:$0xff]
        %v750 = vld [vmem:[%s3 + $0x40] sm:$0xff]
        %v751 = vld [vmem:[%s3 + $0x48] sm:$0xff]
        %v752 = vld [vmem:[%s3 + $0x50] sm:$0xff]
        %v753 = vld [vmem:[%s3 + $0x58] sm:$0xff]
        %v754 = vld [vmem:[%s3 + $0x60] sm:$0xff]
        %v755 = vld [vmem:[%s3 + $0x68] sm:$0xff]
        %v756 = vld [vmem:[%s3 + $0x70] sm:$0xff]
        %v757 = vld [vmem:[%s3 + $0x78] sm:$0xff]
        %759 = vset.pattern.permute.xlu0 0
        %760 = vperm.xlu0 %759, %v742
        %v761 = vpop.permute.xlu0 %760
        %764 = vset.pattern.permute.xlu0 0
        %765 = vperm.xlu0 %764, %v743
        %v766 = vpop.permute.xlu0 %765
        %769 = vset.pattern.permute.xlu0 0
        %770 = vperm.xlu0 %769, %v744
        %v771 = vpop.permute.xlu0 %770
        %774 = vset.pattern.permute.xlu0 0
        %775 = vperm.xlu0 %774, %v745
        %v776 = vpop.permute.xlu0 %775
        %779 = vset.pattern.permute.xlu0 0
        %780 = vperm.xlu0 %779, %v746
        %v781 = vpop.permute.xlu0 %780
        %784 = vset.pattern.permute.xlu0 0
        %785 = vperm.xlu0 %784, %v747
        %v786 = vpop.permute.xlu0 %785
        %789 = vset.pattern.permute.xlu0 0
        %790 = vperm.xlu0 %789, %v748
        %v791 = vpop.permute.xlu0 %790
        %794 = vset.pattern.permute.xlu0 0
        %795 = vperm.xlu0 %794, %v749
        %v796 = vpop.permute.xlu0 %795
        %799 = vset.pattern.permute.xlu0 0
        %800 = vperm.xlu0 %799, %v750
        %v801 = vpop.permute.xlu0 %800
        %804 = vset.pattern.permute.xlu0 0
        %805 = vperm.xlu0 %804, %v751
        %v806 = vpop.permute.xlu0 %805
        %809 = vset.pattern.permute.xlu0 0
        %810 = vperm.xlu0 %809, %v752
        %v811 = vpop.permute.xlu0 %810
        %814 = vset.pattern.permute.xlu0 0
        %815 = vperm.xlu0 %814, %v753
        %v816 = vpop.permute.xlu0 %815
        %819 = vset.pattern.permute.xlu0 0
        %820 = vperm.xlu0 %819, %v754
        %v821 = vpop.permute.xlu0 %820
        %824 = vset.pattern.permute.xlu0 0
        %825 = vperm.xlu0 %824, %v755
        %v826 = vpop.permute.xlu0 %825
        %829 = vset.pattern.permute.xlu0 0
        %830 = vperm.xlu0 %829, %v756
        %v831 = vpop.permute.xlu0 %830
        %834 = vset.pattern.permute.xlu0 0
        %835 = vperm.xlu0 %834, %v757
        %v836 = vpop.permute.xlu0 %835
        %v838 = vadd.f32 %v664, %v761
        %v839 = vadd.f32 %v669, %v766
        %v840 = vadd.f32 %v674, %v771
        %v841 = vadd.f32 %v679, %v776
        %v842 = vadd.f32 %v684, %v781
        %v843 = vadd.f32 %v689, %v786
        %v844 = vadd.f32 %v694, %v791
        %v845 = vadd.f32 %v699, %v796
        %v846 = vadd.f32 %v704, %v801
        %v847 = vadd.f32 %v709, %v806
        %v848 = vadd.f32 %v714, %v811
        %v849 = vadd.f32 %v719, %v816
        %v850 = vadd.f32 %v724, %v821
        %v851 = vadd.f32 %v729, %v826
        %v852 = vadd.f32 %v734, %v831
        %v853 = vadd.f32 %v739, %v836
        %v854 = vmax.f32 %v838, 0.0
        %v855 = vmax.f32 %v839, 0.0
        %v856 = vmax.f32 %v840, 0.0
        %v857 = vmax.f32 %v841, 0.0
        %v858 = vmax.f32 %v842, 0.0
        %v859 = vmax.f32 %v843, 0.0
        %v860 = vmax.f32 %v844, 0.0
        %v861 = vmax.f32 %v845, 0.0
        %v862 = vmax.f32 %v846, 0.0
        %v863 = vmax.f32 %v847, 0.0
        %v864 = vmax.f32 %v848, 0.0
        %v865 = vmax.f32 %v849, 0.0
        %v866 = vmax.f32 %v850, 0.0
        %v867 = vmax.f32 %v851, 0.0
        %v868 = vmax.f32 %v852, 0.0
        %v869 = vmax.f32 %v853, 0.0
        %v870 = vld [vmem:[%s4] sm:$0xff]
        %v871 = vld [vmem:[%s4 + $0x8] sm:$0xff]
        %v872 = vld [vmem:[%s4 + $0x10] sm:$0xff]
        %v873 = vld [vmem:[%s4 + $0x18] sm:$0xff]
        %v874 = vld [vmem:[%s4 + $0x20] sm:$0xff]
        %v875 = vld [vmem:[%s4 + $0x28] sm:$0xff]
        %v876 = vld [vmem:[%s4 + $0x30] sm:$0xff]
        %v877 = vld [vmem:[%s4 + $0x38] sm:$0xff]
        %v878 = vld [vmem:[%s4 + $0x40] sm:$0xff]
        %v879 = vld [vmem:[%s4 + $0x48] sm:$0xff]
        %v880 = vld [vmem:[%s4 + $0x50] sm:$0xff]
        %v881 = vld [vmem:[%s4 + $0x58] sm:$0xff]
        %v882 = vld [vmem:[%s4 + $0x60] sm:$0xff]
        %v883 = vld [vmem:[%s4 + $0x68] sm:$0xff]
        %v884 = vld [vmem:[%s4 + $0x70] sm:$0xff]
        %v885 = vld [vmem:[%s4 + $0x78] sm:$0xff]
        %v886 = vld [vmem:[%s5] sm:$0xff]
        %v887 = vld [vmem:[%s5 + $0x8] sm:$0xff]
        %v888 = vld [vmem:[%s5 + $0x10] sm:$0xff]
        %v889 = vld [vmem:[%s5 + $0x18] sm:$0xff]
        %v890 = vld [vmem:[%s5 + $0x20] sm:$0xff]
        %v891 = vld [vmem:[%s5 + $0x28] sm:$0xff]
        %v892 = vld [vmem:[%s5 + $0x30] sm:$0xff]
        %v893 = vld [vmem:[%s5 + $0x38] sm:$0xff]
        %v894 = vld [vmem:[%s5 + $0x40] sm:$0xff]
        %v895 = vld [vmem:[%s5 + $0x48] sm:$0xff]
        %v896 = vld [vmem:[%s5 + $0x50] sm:$0xff]
        %v897 = vld [vmem:[%s5 + $0x58] sm:$0xff]
        %v898 = vld [vmem:[%s5 + $0x60] sm:$0xff]
        %v899 = vld [vmem:[%s5 + $0x68] sm:$0xff]
        %v900 = vld [vmem:[%s5 + $0x70] sm:$0xff]
        %v901 = vld [vmem:[%s5 + $0x78] sm:$0xff]
        %903 = vset.pattern.permute.xlu0 0
        %904 = vperm.xlu0 %903, %v886
        %v905 = vpop.permute.xlu0 %904
        %908 = vset.pattern.permute.xlu0 0
        %909 = vperm.xlu0 %908, %v887
        %v910 = vpop.permute.xlu0 %909
        %913 = vset.pattern.permute.xlu0 0
        %914 = vperm.xlu0 %913, %v888
        %v915 = vpop.permute.xlu0 %914
        %918 = vset.pattern.permute.xlu0 0
        %919 = vperm.xlu0 %918, %v889
        %v920 = vpop.permute.xlu0 %919
        %923 = vset.pattern.permute.xlu0 0
        %924 = vperm.xlu0 %923, %v890
        %v925 = vpop.permute.xlu0 %924
        %928 = vset.pattern.permute.xlu0 0
        %929 = vperm.xlu0 %928, %v891
        %v930 = vpop.permute.xlu0 %929
        %933 = vset.pattern.permute.xlu0 0
        %934 = vperm.xlu0 %933, %v892
        %v935 = vpop.permute.xlu0 %934
        %938 = vset.pattern.permute.xlu0 0
        %939 = vperm.xlu0 %938, %v893
        %v940 = vpop.permute.xlu0 %939
        %943 = vset.pattern.permute.xlu0 0
        %944 = vperm.xlu0 %943, %v894
        %v945 = vpop.permute.xlu0 %944
        %948 = vset.pattern.permute.xlu0 0
        %949 = vperm.xlu0 %948, %v895
        %v950 = vpop.permute.xlu0 %949
        %953 = vset.pattern.permute.xlu0 0
        %954 = vperm.xlu0 %953, %v896
        %v955 = vpop.permute.xlu0 %954
        %958 = vset.pattern.permute.xlu0 0
        %959 = vperm.xlu0 %958, %v897
        %v960 = vpop.permute.xlu0 %959
        %963 = vset.pattern.permute.xlu0 0
        %964 = vperm.xlu0 %963, %v898
        %v965 = vpop.permute.xlu0 %964
        %968 = vset.pattern.permute.xlu0 0
        %969 = vperm.xlu0 %968, %v899
        %v970 = vpop.permute.xlu0 %969
        %973 = vset.pattern.permute.xlu0 0
        %974 = vperm.xlu0 %973, %v900
        %v975 = vpop.permute.xlu0 %974
        %978 = vset.pattern.permute.xlu0 0
        %979 = vperm.xlu0 %978, %v901
        %v980 = vpop.permute.xlu0 %979
        %982 = vmatprep.subr.mxu0 0.0
        %983 = vmatpush1.msra.mxu0 %v854
        %984 = vmatprep.subr.mxu0 0.0
        %985 = vmatpush1.msra.mxu0 %v855
        %986 = vmatprep.subr.mxu0 0.0
        %987 = vmatpush1.msra.mxu0 %v856
        %988 = vmatprep.subr.mxu0 0.0
        %989 = vmatpush1.msra.mxu0 %v857
        %990 = vmatprep.subr.mxu0 0.0
        %991 = vmatpush1.msra.mxu0 %v858
        %992 = vmatprep.subr.mxu0 0.0
        %993 = vmatpush1.msra.mxu0 %v859
        %994 = vmatprep.subr.mxu0 0.0
        %995 = vmatpush1.msra.mxu0 %v860
        %996 = vmatprep.subr.mxu0 0.0
        %997 = vmatpush1.msra.mxu0 %v861
        %998 = vmatprep.subr.mxu0 0.0
        %999 = vmatpush1.msra.mxu0 %v862
        %1000 = vmatprep.subr.mxu0 0.0
        %1001 = vmatpush1.msra.mxu0 %v863
        %1002 = vmatprep.subr.mxu0 0.0
        %1003 = vmatpush1.msra.mxu0 %v864
        %1004 = vmatprep.subr.mxu0 0.0
        %1005 = vmatpush1.msra.mxu0 %v865
        %1006 = vmatprep.subr.mxu0 0.0
        %1007 = vmatpush1.msra.mxu0 %v866
        %1008 = vmatprep.subr.mxu0 0.0
        %1009 = vmatpush1.msra.mxu0 %v867
        %1010 = vmatprep.subr.mxu0 0.0
        %1011 = vmatpush1.msra.mxu0 %v868
        %1012 = vmatprep.subr.mxu0 0.0
        %1013 = vmatpush1.msra.mxu0 %v869
        %1014 = vmatprep.subr.mxu0 0.0
        %1015 = vmatpush1.msra.mxu0 0.0
        %1016 = vmatprep.subr.mxu0 0.0
        %1017 = vmatpush1.msra.mxu0 0.0
        %1018 = vmatprep.subr.mxu0 0.0
        %1019 = vmatpush1.msra.mxu0 0.0
        %1020 = vmatprep.subr.mxu0 0.0
        %1021 = vmatpush1.msra.mxu0 0.0
        %1022 = vmatprep.subr.mxu0 0.0
        %1023 = vmatpush1.msra.mxu0 0.0
        %1024 = vmatprep.subr.mxu0 0.0
        %1025 = vmatpush1.msra.mxu0 0.0
        %1026 = vmatprep.subr.mxu0 0.0
        %1027 = vmatpush1.msra.mxu0 0.0
        %1028 = vmatprep.subr.mxu0 0.0
        %1029 = vmatpush1.msra.mxu0 0.0
        %1030 = vmatprep.subr.mxu0 0.0
        %1031 = vmatpush1.msra.mxu0 0.0
        %1032 = vmatprep.subr.mxu0 0.0
        %1033 = vmatpush1.msra.mxu0 0.0
        %1034 = vmatprep.subr.mxu0 0.0
        %1035 = vmatpush1.msra.mxu0 0.0
        %1036 = vmatprep.subr.mxu0 0.0
        %1037 = vmatpush1.msra.mxu0 0.0
        %1038 = vmatprep.subr.mxu0 0.0
        %1039 = vmatpush1.msra.mxu0 0.0
        %1040 = vmatprep.subr.mxu0 0.0
        %1041 = vmatpush1.msra.mxu0 0.0
        %1042 = vmatprep.subr.mxu0 0.0
        %1043 = vmatpush1.msra.mxu0 0.0
        %1044 = vmatprep.subr.mxu0 0.0
        %1045 = vmatpush1.msra.mxu0 0.0
        %1046 = vmatprep.mubr.f32.mxu0 0.0
        %1047 = vmatmul.mubr.f32.gmra.mrb[0].mxu0 %v870
        %v1048 = vpop.f32.mrb[0].mxu0
        %v1049 = vadd.f32 %v905, %v1048
        %v1050 = vpop.f32.mrb[0].mxu0
        %1051 = vmatprep.mubr.f32.mxu0 0.0
        %1052 = vmatmul.mubr.f32.gmra.mrb[0].mxu0 %v871
        %v1053 = vpop.f32.mrb[0].mxu0
        %v1054 = vadd.f32 %v910, %v1053
        %v1055 = vpop.f32.mrb[0].mxu0
        %1056 = vmatprep.mubr.f32.mxu0 0.0
        %1057 = vmatmul.mubr.f32.gmra.mrb[0].mxu0 %v872
        %v1058 = vpop.f32.mrb[0].mxu0
        %v1059 = vadd.f32 %v915, %v1058
        %v1060 = vpop.f32.mrb[0].mxu0
        %1061 = vmatprep.mubr.f32.mxu0 0.0
        %1062 = vmatmul.mubr.f32.gmra.mrb[0].mxu0 %v873
        %v1063 = vpop.f32.mrb[0].mxu0
        %v1064 = vadd.f32 %v920, %v1063
        %v1065 = vpop.f32.mrb[0].mxu0
        %1066 = vmatprep.mubr.f32.mxu0 0.0
        %1067 = vmatmul.mubr.f32.gmra.mrb[0].mxu0 %v874
        %v1068 = vpop.f32.mrb[0].mxu0
        %v1069 = vadd.f32 %v925, %v1068
        %v1070 = vpop.f32.mrb[0].mxu0
        %1071 = vmatprep.mubr.f32.mxu0 0.0
        %1072 = vmatmul.mubr.f32.gmra.mrb[0].mxu0 %v875
        %v1073 = vpop.f32.mrb[0].mxu0
        %v1074 = vadd.f32 %v930, %v1073
        %v1075 = vpop.f32.mrb[0].mxu0
        %1076 = vmatprep.mubr.f32.mxu0 0.0
        %1077 = vmatmul.mubr.f32.gmra.mrb[0].mxu0 %v876
        %v1078 = vpop.f32.mrb[0].mxu0
        %v1079 = vadd.f32 %v935, %v1078
        %v1080 = vpop.f32.mrb[0].mxu0
        %1081 = vmatprep.mubr.f32.mxu0 0.0
        %1082 = vmatmul.mubr.f32.gmra.mrb[0].mxu0 %v877
        %v1083 = vpop.f32.mrb[0].mxu0
        %v1084 = vadd.f32 %v940, %v1083
        %v1085 = vpop.f32.mrb[0].mxu0
        %1086 = vmatprep.mubr.f32.mxu0 0.0
        %1087 = vmatmul.mubr.f32.gmra.mrb[0].mxu0 %v878
        %v1088 = vpop.f32.mrb[0].mxu0
        %v1089 = vadd.f32 %v945, %v1088
        %v1090 = vpop.f32.mrb[0].mxu0
        %1091 = vmatprep.mubr.f32.mxu0 0.0
        %1092 = vmatmul.mubr.f32.gmra.mrb[0].mxu0 %v879
        %v1093 = vpop.f32.mrb[0].mxu0
        %v1094 = vadd.f32 %v950, %v1093
        %v1095 = vpop.f32.mrb[0].mxu0
        %1096 = vmatprep.mubr.f32.mxu0 0.0
        %1097 = vmatmul.mubr.f32.gmra.mrb[0].mxu0 %v880
        %v1098 = vpop.f32.mrb[0].mxu0
        %v1099 = vadd.f32 %v955, %v1098
        %v1100 = vpop.f32.mrb[0].mxu0
        %1101 = vmatprep.mubr.f32.mxu0 0.0
        %1102 = vmatmul.mubr.f32.gmra.mrb[0].mxu0 %v881
        %v1103 = vpop.f32.mrb[0].mxu0
        %v1104 = vadd.f32 %v960, %v1103
        %v1105 = vpop.f32.mrb[0].mxu0
        %1106 = vmatprep.mubr.f32.mxu0 0.0
        %1107 = vmatmul.mubr.f32.gmra.mrb[0].mxu0 %v882
        %v1108 = vpop.f32.mrb[0].mxu0
        %v1109 = vadd.f32 %v965, %v1108
        %v1110 = vpop.f32.mrb[0].mxu0
        %1111 = vmatprep.mubr.f32.mxu0 0.0
        %1112 = vmatmul.mubr.f32.gmra.mrb[0].mxu0 %v883
        %v1113 = vpop.f32.mrb[0].mxu0
        %v1114 = vadd.f32 %v970, %v1113
        %v1115 = vpop.f32.mrb[0].mxu0
        %1116 = vmatprep.mubr.f32.mxu0 0.0
        %1117 = vmatmul.mubr.f32.gmra.mrb[0].mxu0 %v884
        %v1118 = vpop.f32.mrb[0].mxu0
        %v1119 = vadd.f32 %v975, %v1118
        %v1120 = vpop.f32.mrb[0].mxu0
        %1121 = vmatprep.mubr.f32.mxu0 0.0
        %1122 = vmatmul.mubr.f32.gmra.mrb[0].mxu0 %v885
        %v1123 = vpop.f32.mrb[0].mxu0
        %v1124 = vadd.f32 %v980, %v1123
        %v1125 = vpop.f32.mrb[0].mxu0
        %1126 = vdwg.mxu0
        %v1127 = vmax.f32 %v1049, 0.0
        %v1128 = vmax.f32 %v1054, 0.0
        %v1129 = vmax.f32 %v1059, 0.0
        %v1130 = vmax.f32 %v1064, 0.0
        %v1131 = vmax.f32 %v1069, 0.0
        %v1132 = vmax.f32 %v1074, 0.0
        %v1133 = vmax.f32 %v1079, 0.0
        %v1134 = vmax.f32 %v1084, 0.0
        %v1135 = vmax.f32 %v1089, 0.0
        %v1136 = vmax.f32 %v1094, 0.0
        %v1137 = vmax.f32 %v1099, 0.0
        %v1138 = vmax.f32 %v1104, 0.0
        %v1139 = vmax.f32 %v1109, 0.0
        %v1140 = vmax.f32 %v1114, 0.0
        %v1141 = vmax.f32 %v1119, 0.0
        %v1142 = vmax.f32 %v1124, 0.0
        %v1143 = vld [vmem:[%s6] sm:$0x1]
        %v1144 = vld [vmem:[#allocation2] sm:$0x1]
        %1146 = vset.pattern.permute.xlu0 0
        %1147 = vperm.xlu0 %1146, %v1144
        %v1148 = vpop.permute.xlu0 %1147
        %v1150 = vlaneseq
        %v1151 = vshrl.u32 %v1150, 7
        %v1152 = vsub.s32 0, %v1151
        %v1153 = vrot.slane %v1148, %v1152
        %1154 = vmatprep.subr.mxu0 0.0
        %1155 = vmatpush1.msra.mxu0 %v1127
        %1156 = vmatprep.subr.mxu0 0.0
        %1157 = vmatpush1.msra.mxu0 %v1128
        %1158 = vmatprep.subr.mxu0 0.0
        %1159 = vmatpush1.msra.mxu0 %v1129
        %1160 = vmatprep.subr.mxu0 0.0
        %1161 = vmatpush1.msra.mxu0 %v1130
        %1162 = vmatprep.subr.mxu0 0.0
        %1163 = vmatpush1.msra.mxu0 %v1131
        %1164 = vmatprep.subr.mxu0 0.0
        %1165 = vmatpush1.msra.mxu0 %v1132
        %1166 = vmatprep.subr.mxu0 0.0
        %1167 = vmatpush1.msra.mxu0 %v1133
        %1168 = vmatprep.subr.mxu0 0.0
        %1169 = vmatpush1.msra.mxu0 %v1134
        %1170 = vmatprep.subr.mxu0 0.0
        %1171 = vmatpush1.msra.mxu0 %v1135
        %1172 = vmatprep.subr.mxu0 0.0
        %1173 = vmatpush1.msra.mxu0 %v1136
        %1174 = vmatprep.subr.mxu0 0.0
        %1175 = vmatpush1.msra.mxu0 %v1137
        %1176 = vmatprep.subr.mxu0 0.0
        %1177 = vmatpush1.msra.mxu0 %v1138
        %1178 = vmatprep.subr.mxu0 0.0
        %1179 = vmatpush1.msra.mxu0 %v1139
        %1180 = vmatprep.subr.mxu0 0.0
        %1181 = vmatpush1.msra.mxu0 %v1140
        %1182 = vmatprep.subr.mxu0 0.0
        %1183 = vmatpush1.msra.mxu0 %v1141
        %1184 = vmatprep.subr.mxu0 0.0
        %1185 = vmatpush1.msra.mxu0 %v1142
        %1186 = vmatprep.subr.mxu0 0.0
        %1187 = vmatpush1.msra.mxu0 0.0
        %1188 = vmatprep.subr.mxu0 0.0
        %1189 = vmatpush1.msra.mxu0 0.0
        %1190 = vmatprep.subr.mxu0 0.0
        %1191 = vmatpush1.msra.mxu0 0.0
        %1192 = vmatprep.subr.mxu0 0.0
        %1193 = vmatpush1.msra.mxu0 0.0
        %1194 = vmatprep.subr.mxu0 0.0
        %1195 = vmatpush1.msra.mxu0 0.0
        %1196 = vmatprep.subr.mxu0 0.0
        %1197 = vmatpush1.msra.mxu0 0.0
        %1198 = vmatprep.subr.mxu0 0.0
        %1199 = vmatpush1.msra.mxu0 0.0
        %1200 = vmatprep.subr.mxu0 0.0
        %1201 = vmatpush1.msra.mxu0 0.0
        %1202 = vmatprep.subr.mxu0 0.0
        %1203 = vmatpush1.msra.mxu0 0.0
        %1204 = vmatprep.subr.mxu0 0.0
        %1205 = vmatpush1.msra.mxu0 0.0
        %1206 = vmatprep.subr.mxu0 0.0
        %1207 = vmatpush1.msra.mxu0 0.0
        %1208 = vmatprep.subr.mxu0 0.0
        %1209 = vmatpush1.msra.mxu0 0.0
        %1210 = vmatprep.subr.mxu0 0.0
        %1211 = vmatpush1.msra.mxu0 0.0
        %1212 = vmatprep.subr.mxu0 0.0
        %1213 = vmatpush1.msra.mxu0 0.0
        %1214 = vmatprep.subr.mxu0 0.0
        %1215 = vmatpush1.msra.mxu0 0.0
        %1216 = vmatprep.subr.mxu0 0.0
        %1217 = vmatpush1.msra.mxu0 0.0
        %1218 = vmatprep.mubr.f32.mxu0 0.0
        %1219 = vmatmul.mubr.f32.gmra.mrb[0].mxu0 %v1143
        %v1220 = vpop.f32.mrb[0].mxu0
        %v1221 = vadd.f32 %v1153, %v1220
        %v1222 = vpop.f32.mrb[0].mxu0
        %1223 = vdwg.mxu0
        %1224 = vst [vmem:[%s308] sm:$0x1] %v1221
        %s1225 = sand.u32 %s210, 1
        %s1226 = scalar_lea.sflag [#allocation4], %s1225
        %s1227 = sand.u32 %s210, 1
        %s1228 = scalar_lea.vmem [#allocation3], %s1227
        // Predicated region
        $region53: #{tpu_custom_call.1} parent=51 // pred_check
          %p1229 = pneg %p220
        $region54: #{tpu_custom_call.1} parent=51 // pred_check_branch
          %1231 = sbr.rel (%p1229) target = $region56
        $region55: #{tpu_custom_call.1} parent=51 // pred_region
          %s1233 = ssub.s32 16, 16
          %1234 = vsyncadd %s1226, %s1233
          %s1235 = smul.addr %s24, 16
          %s1236 = scalar_lea.hbm %s8, %s1235
          %s1238 = sshll.u32 %s1228, 4
          %s1239 = int_to_ptr.vmem [resolvable:$true] %s1238
          %1241 = dma.vmem_to_hbm [thread:$0]  %s1239, 16, %s1236, %s1226
        $region56: #{tpu_custom_call.1} parent=51 // pred_fallthru
          _
      $region52: #{tpu_custom_call.1} parent=5 // pred_fallthru
        _
      %p1242 = scmp.le.s32.totalorder 2, %s19
      // Predicated region
      $region57: #{tpu_custom_call.1} parent=5 // pred_check
        %p1243 = pneg %p1242
      $region58: #{tpu_custom_call.1} parent=5 // pred_check_branch
        %1245 = sbr.rel (%p1243) target = $region60
      $region59: #{tpu_custom_call.1} parent=5 // pred_region
        %s1246 = ssub.s32 %s19, 2
        // Predicated region
        $region61: #{tpu_custom_call.1} parent=59 // pred_check
          %p1247 = pneg %p226
        $region62: #{tpu_custom_call.1} parent=59 // pred_check_branch
          %1249 = sbr.rel (%p1247) target = $region64
        $region63: #{tpu_custom_call.1} parent=59 // pred_region
          %s1250 = sand.u32 %s211, 1
          %s1251 = scalar_lea.sflag [#allocation4], %s1250
          %s1252 = sand.u32 %s211, 1
          %s1253 = scalar_lea.vmem [#allocation3], %s1252
          %1254 = dma.done %s1251, 16
        $region64: #{tpu_custom_call.1} parent=59 // pred_fallthru
          _
      $region60: #{tpu_custom_call.1} parent=5 // pred_fallthru
        _
    $region6: #{tpu_custom_call.1} parent=1 // loop_footer
      %s23 = sadd.s32 1, %s19
    $region7: #{tpu_custom_call.1} parent=1 // loop_footer_branch
      %18 = sbr.rel target = $region3
    $region8: #{tpu_custom_call.1} parent=1 // loop_exit
      _
    %1255 = vsyncpa [#allocation4], 1
    %s1256 = scalar_lea.sflag [#allocation4], 1
    %1257 = vsyncpa %s1256, 1

</llo_original>
